<compile_context>
chip_gen: v6e
topology: v6e:2x2x1
jax: 0.10.0
libtpu: 0.0.40
codegen_flags: <defaults>
</compile_context>

<pallas_src>
import math

import jax
import jax.numpy as jnp
from jax.experimental import pallas as pl
from jax.experimental.pallas import tpu as pltpu


# ----------------------------------------------------------------------------
# Zero-copy aliased pass-through (recommended identity path).
# ----------------------------------------------------------------------------
def _alias_kernel(x_ref, o_ref):
    # o_ref aliases x_ref (same HBM buffer); no data movement is needed.
    # touch() pins a fake read+write dependency so the aliased output counts
    # as produced without emitting any per-block DMAs.
    del x_ref
    pltpu.touch(o_ref)


def _identity_alias(x: jnp.ndarray) -> jnp.ndarray:
    return pl.pallas_call(
        _alias_kernel,
        out_shape=jax.ShapeDtypeStruct(x.shape, x.dtype),
        in_specs=[pl.BlockSpec(memory_space=pl.ANY)],
        out_specs=pl.BlockSpec(memory_space=pl.ANY),
        input_output_aliases={0: 0},
        compiler_params=pltpu.CompilerParams(has_side_effects=True),
    )(x)


# ----------------------------------------------------------------------------
# Materializing lane-dense copy kernel (only when a fresh buffer is required).
# ----------------------------------------------------------------------------
def _copy_kernel(x_ref, o_ref):
    o_ref[...] = x_ref[...]


_LANE_CANDIDATES = (512, 1024, 2048, 256, 128)   # prefer deep + lane-dense
_TARGET_BLOCK_BYTES = 4 * 1024 * 1024            # keep well <= 8 MiB for v7x
_VMEM_LIMIT_BYTES = 32 * 1024 * 1024             # == v7x default scoped limit


def _sublane_multiple(dtype) -> int:
    # Packed-sublane granularity: 8 rows (32-bit), 16 (16-bit), 32 (8-bit).
    return {4: 8, 2: 16, 1: 32}.get(jnp.dtype(dtype).itemsize, 8)


def _identity_copy(x: jnp.ndarray) -> jnp.ndarray:
    shape = x.shape
    total = math.prod(shape)
    mult = _sublane_multiple(x.dtype)
    itemsize = jnp.dtype(x.dtype).itemsize

    # Pick a lane-dense last dim; prefer one whose row count is a multiple of
    # the sublane packing so every tile is fully (8,128)-aligned.
    lanes = next((l for l in _LANE_CANDIDATES
                  if total % l == 0 and (total // l) % mult == 0), None)
    if lanes is None:
        lanes = next((l for l in _LANE_CANDIDATES if total % l == 0), None)

    if lanes is None:
        # Element count not a multiple of 128: one full-extent (1, total) block
        # (full trailing dims bypass the (8,128) rule) — no masked tiny tiles.
        # TODO(synk): pad-to-128 + slice for very large non-128-divisible tensors.
        x2d = x.reshape(1, total)
        spec = pl.BlockSpec((1, total), lambda i: (0, 0))
        y2d = pl.pallas_call(
            _copy_kernel,
            out_shape=jax.ShapeDtypeStruct((1, total), x.dtype),
            grid=(1,),
            in_specs=[spec],
            out_specs=spec,
            compiler_params=pltpu.CompilerParams(
                vmem_limit_bytes=_VMEM_LIMIT_BYTES),
        )(x2d)
        return y2d.reshape(shape)

    rows = total // lanes
    row_bytes = lanes * itemsize
    block_rows = max(1, _TARGET_BLOCK_BYTES // row_bytes)
    if block_rows >= rows:
        block_rows = rows                              # one block along rows
    else:
        block_rows = max(mult, (block_rows // mult) * mult)  # dtype-aware round
    grid = (pl.cdiv(rows, block_rows),)
    spec = pl.BlockSpec((block_rows, lanes), lambda i: (i, 0))

    y2d = pl.pallas_call(
        _copy_kernel,
        out_shape=jax.ShapeDtypeStruct((rows, lanes), x.dtype),
        grid=grid,
        in_specs=[spec],
        out_specs=spec,
        compiler_params=pltpu.CompilerParams(
            dimension_semantics=("parallel",),
            vmem_limit_bytes=_VMEM_LIMIT_BYTES,
        ),
    )(x.reshape(rows, lanes))
    return y2d.reshape(shape)


# ----------------------------------------------------------------------------
# Public forward.
# ----------------------------------------------------------------------------
def center_crop_forward(x: jnp.ndarray, *, materialize: bool = False) -> jnp.ndarray:
    """Pallas implementation of CenterCrop.forward (identity).

    materialize=False (default): zero-copy aliased pass-through (no DMAs).
    materialize=True: lane-dense tiled copy producing a fresh output buffer.
    """
    if materialize:
        return _identity_copy(x)
    try:
        return _identity_alias(x)
    except Exception:
        # Defensive fallback (e.g. jax builds without pltpu.touch lowering for
        # ANY-space refs): fall back to the tiled copy kernel.
        return _identity_copy(x)


if __name__ == "__main__":
    key = jax.random.PRNGKey(0)
    key_f32, key_u8 = jax.random.split(key)

    # Small CIFAR-10-like input: batch=2, channels=4, spatial=16x16 (NCHW).
    x = jax.random.normal(key_f32, (2, 4, 16, 16), dtype=jnp.float32)

    # 1) Zero-copy aliased pass-through (recommended identity path).
    y = jax.block_until_ready(center_crop_forward(x))
    assert y.shape == x.shape and y.dtype == x.dtype
    assert bool(jnp.all(y == x))

    # 2) Materializing lane-dense copy kernel (fresh output buffer).
    y2 = jax.block_until_ready(center_crop_forward(x, materialize=True))
    assert y2.shape == x.shape and y2.dtype == x.dtype
    assert bool(jnp.all(y2 == x))

    # 3) uint8 CIFAR-style pixels exercise the dtype-aware sublane rounding.
    xu8 = jax.random.randint(key_u8, (2, 4, 16, 16), 0, 256,
                             dtype=jnp.int32).astype(jnp.uint8)
    yu8 = jax.block_until_ready(center_crop_forward(xu8, materialize=True))
    assert yu8.shape == xu8.shape and yu8.dtype == xu8.dtype
    assert bool(jnp.all(yu8 == xu8))

    print("KERNEL_OK")
</pallas_src>

<mosaic_0001>
module attributes {stable_mosaic.version = 11 : i64} {
  func.func @_alias_kernel(%arg0: memref<2x4x16x16xf32, #tpu.memory_space<any>>, %arg1: memref<2x4x16x16xf32, #tpu.memory_space<any>>) attributes {dimension_semantics = [], scalar_prefetch = 0 : i64, scratch_operands = 0 : i64, tpu.core_type = #tpu.core_type<tc>} {
    return
  }
}

module attributes {stable_mosaic.version = 11 : i64} {
  func.func @_copy_kernel(%arg0: i32, %arg1: memref<8x256xf32, #tpu.memory_space<vmem>>, %arg2: memref<8x256xf32, #tpu.memory_space<vmem>>) attributes {dimension_semantics = [#tpu.dimension_semantics<parallel>], iteration_bounds = array<i64: 1>, scalar_prefetch = 0 : i64, scratch_operands = 0 : i64, tpu.core_type = #tpu.core_type<tc>, window_params = [{transform_indices = @transform_0, window_bounds = array<i64: 8, 256>}, {transform_indices = @transform_1, window_bounds = array<i64: 8, 256>}]} {
    %c0 = arith.constant 0 : index
    %c0_0 = arith.constant 0 : index
    %0 = vector.load %arg1[%c0, %c0_0] : memref<8x256xf32, #tpu.memory_space<vmem>>, vector<8x256xf32>
    %c0_1 = arith.constant 0 : index
    %c0_2 = arith.constant 0 : index
    %1 = vector.load %arg2[%c0_1, %c0_2] : memref<8x256xf32, #tpu.memory_space<vmem>>, vector<8x256xf32>
    tpu.vector_store %arg2[%c0_1, %c0_2], %0 {strides = array<i32>} : memref<8x256xf32, #tpu.memory_space<vmem>>, vector<8x256xf32>,
    return
  }
  func.func @transform_0(%arg0: i32) -> (i32, i32) {
    %c0_i32 = arith.constant 0 : i32
    %c0_i32_0 = arith.constant 0 : i32
    return %arg0, %c0_i32 : i32, i32
  }
  func.func @transform_1(%arg0: i32) -> (i32, i32) {
    %c0_i32 = arith.constant 0 : i32
    %c0_i32_0 = arith.constant 0 : i32
    return %arg0, %c0_i32 : i32, i32
  }
}

</mosaic_0001>

<llo_original>
// kernel: tpu_custom_call.1
$region0: #{tpu_custom_call.1}
  #allocation0 [shape = 'u32[]', space=smem, size = 0x4, offset = 0x4, fixed_abs, tag = 'smem constant byte address 0x4 - core index']
  #allocation1 [shape = 'u32[144,128]{1,0:T(1,128)}', space=vmem, size = 0x12000, scoped, tag = 'internal scratch']
  %s0 = inlined_call_operand.hbm [shape: f32[2,4,16,16], index: 0, kind: input, shape index: {}, may-alias: {0,1}]
  %s1 = inlined_call_operand.hbm [shape: f32[2,4,16,16], index: 1, kind: output, shape index: {}, may-alias: {0,1}]
  %s2 = sld [smem:[#allocation0]]
  $region2: #{tpu_custom_call.1} parent=0
    _
  %s4 = ssub.s32 1, %s2
  %s5 = scalar_select 0, %s4, %s2

// kernel: tpu_custom_call.1
$region0: #{tpu_custom_call.1}
  #allocation0 [shape = 'u32[]', space=smem, size = 0x4, offset = 0x4, fixed_abs, tag = 'smem constant byte address 0x4 - core index']
  #allocation1 [shape = 'u32[144,128]{1,0:T(1,128)}', space=vmem, size = 0x12000, scoped, tag = 'internal scratch']
  %s0 = inlined_call_operand.hbm [shape: f32[8,256], index: 0, kind: input, shape index: {}]
  %s1 = inlined_call_operand.hbm [shape: f32[8,256], index: 1, kind: output, shape index: {}]
  %s2 = sld [smem:[#allocation0]]
  $region18: #{tpu_custom_call.1} parent=0
    _
  %s4 = ssub.s32 1, %s2
  %s5 = scalar_select 0, %s4, %s2
  $region1: #{tpu_custom_call.1} parent=0
    #allocation2 [shape = 'u8[8192]{0}', space=vmem, size = 0x2000, scoped, tag = 'input window, operand 0, single buffered']
    #allocation3 [shape = 's32[1]{0}', space=sflag, size = 0x4, scoped, tag = 'scoped memory for tpu_custom_call.1']
    #allocation4 [shape = 's32[1]{0}', space=sflag, size = 0x4, scoped, tag = 'scoped memory for tpu_custom_call.1']
    #allocation5 [shape = 'u8[8192]{0}', space=vmem, size = 0x2000, scoped, tag = 'output window, operand 0, single buffered']
    %6 = vsyncpa [#allocation3], 0
    %7 = vsyncpa [#allocation4], 0
    // Predicated region
    $region2: #{tpu_custom_call.1} parent=1 // pred_check
      _
    $region3: #{tpu_custom_call.1} parent=1 // pred_check_branch
      %9 = sbr.rel (0) target = $region5
    $region4: #{tpu_custom_call.1} parent=1 // pred_region
      %s11 = ssub.s32 256, 256
      %12 = vsyncadd [#allocation3], %s11
      %s14 = sshll.u32 [#allocation2], 4
      %s15 = int_to_ptr.vmem [resolvable:$true] %s14
      %17 = dma.hbm_to_vmem [thread:$0]  %s0, 256, %s15, [#allocation3]
    $region5: #{tpu_custom_call.1} parent=1 // pred_fallthru
      _
    // Predicated region
    $region6: #{tpu_custom_call.1} parent=1 // pred_check
      _
    $region7: #{tpu_custom_call.1} parent=1 // pred_check_branch
      %19 = sbr.rel (0) target = $region9
    $region8: #{tpu_custom_call.1} parent=1 // pred_region
      %20 = dma.done [#allocation3], 256
    $region9: #{tpu_custom_call.1} parent=1 // pred_fallthru
      _
    %v21 = vld [vmem:[#allocation2] sm:$0xff]
    %v22 = vld [vmem:[#allocation2 + $0x8] sm:$0xff]
    %23 = vst [vmem:[#allocation5] sm:$0xff] %v21
    %24 = vst [vmem:[#allocation5 + $0x8] sm:$0xff] %v22
    // Predicated region
    $region10: #{tpu_custom_call.1} parent=1 // pred_check
      _
    $region11: #{tpu_custom_call.1} parent=1 // pred_check_branch
      %26 = sbr.rel (0) target = $region13
    $region12: #{tpu_custom_call.1} parent=1 // pred_region
      %s28 = ssub.s32 256, 256
      %29 = vsyncadd [#allocation4], %s28
      %s31 = sshll.u32 [#allocation5], 4
      %s32 = int_to_ptr.vmem [resolvable:$true] %s31
      %34 = dma.vmem_to_hbm [thread:$0]  %s32, 256, %s1, [#allocation4]
    $region13: #{tpu_custom_call.1} parent=1 // pred_fallthru
      _
    // Predicated region
    $region14: #{tpu_custom_call.1} parent=1 // pred_check
      _
    $region15: #{tpu_custom_call.1} parent=1 // pred_check_branch
      %36 = sbr.rel (0) target = $region17
    $region16: #{tpu_custom_call.1} parent=1 // pred_region
      %37 = dma.done [#allocation4], 256
    $region17: #{tpu_custom_call.1} parent=1 // pred_fallthru
      _
    %38 = vsyncpa [#allocation3], 1
    %39 = vsyncpa [#allocation4], 1

</llo_original>
